<compile_context>
chip_gen: v7x
topology: tpu7x:2x2x1
jax: 0.10.0
libtpu: 0.0.40
codegen_flags: <defaults>
</compile_context>

<pallas_src>
import jax
import jax.numpy as jnp
from jax.experimental import pallas as pl
from jax.experimental.pallas import tpu as pltpu

F_IN = 7      # input features of the PyTorch module
F_AUG = 8     # 7 features + 1 ones column (feeds the folded d1+d2 bias)
H_MID = 200   # width after the fused d1+d2 layer
H_OUT = 50    # width after d3


def _round_up(n: int, m: int) -> int:
    return ((n + m - 1) // m) * m


def mlp_kernel(x_ref, w12_ref, w3_ref, w4t_ref, b3_ref, b4_ref, o_ref):
    # x: (TILE_B, 8) f32 — batch rows on sublanes, 7 features + ones column
    # on lanes.  Cast to bf16 so the MXU runs its native bf16 path.
    x = x_ref[...].astype(jnp.bfloat16)

    # Fused d1+d2 with b12 folded into row 7 of W12 (ones column in x):
    # (TILE_B,8) @ (8,200) -> f32 accumulate, then ReLU (relu0).
    h = jnp.dot(x, w12_ref[...], preferred_element_type=jnp.float32)
    h = jnp.maximum(h, 0.0)

    # d3: (TILE_B,200) @ (200,50) + b3, then ReLU (relu1).
    h = jnp.dot(h.astype(jnp.bfloat16), w3_ref[...],
                preferred_element_type=jnp.float32)
    h = jnp.maximum(h + b3_ref[...], 0.0)

    # d4, computed transposed so the result is lane-dense:
    #   (1,50) . (TILE_B,50) contracted over the 50-dim -> (1, TILE_B).
    # TODO(synk): verify with pl.lower_as_mlir that this transposed-RHS
    # matmul does not emit an explicit (TILE_B,50)->(50,TILE_B) vxpose of h.
    y = jax.lax.dot_general(w4t_ref[...], h.astype(jnp.bfloat16),
                            (((1,), (1,)), ((), ())),
                            preferred_element_type=jnp.float32)
    y = y + b4_ref[0, 0]                 # scalar bias read from SMEM

    # Sigmoid on a lane-dense (1, TILE_B) row; unmasked lane-dense store.
    o_ref[0] = jax.nn.sigmoid(y)


def _choose_tile(B: int, tile_b: int) -> int:
    """Batch tile: multiple of 8, capped at the batch, >= 2 tiles if possible."""
    b_pad8 = _round_up(max(B, 1), 8)
    tile = _round_up(min(tile_b, b_pad8), 8)
    # Keep at least 2 grid steps when there is enough work so the "parallel"
    # batch axis can be sharded across both TensorCores on v7x.
    if b_pad8 >= 16 and tile >= b_pad8:
        tile = _round_up(-(-b_pad8 // 2), 8)
    return tile


def dl_model_forward(x, params, *, tile_b=2048):
    """x: (B, 7) float32.  params: (in,out) weights and (1,out) biases."""
    B = x.shape[0]
    assert x.shape[1] == F_IN

    # ---- algebraic fusion of d1+d2 (no nonlinearity between them) ----
    w12 = params["w1"] @ params["w2"]                     # (7, 200) f32
    b12 = params["b1"] @ params["w2"] + params["b2"]      # (1, 200) f32
    # Fold b12 into the matmul as the 8th row of W12; cast weights to bf16.
    w12_aug = jnp.concatenate([w12, b12], axis=0).astype(jnp.bfloat16)  # (8,200)
    w3 = params["w3"].astype(jnp.bfloat16)                # (200, 50)
    w4t = params["w4"].T.astype(jnp.bfloat16)             # (1, 50)
    b3 = params["b3"].astype(jnp.float32)                 # (1, 50)  VMEM
    b4 = params["b4"].astype(jnp.float32)                 # (1, 1)   SMEM scalar

    # Append the ones column that feeds b12 through the first matmul.
    x_aug = jnp.concatenate(
        [x.astype(jnp.float32), jnp.ones((B, 1), jnp.float32)], axis=1)  # (B, 8)

    # ---- batch tiling ----
    tile = _choose_tile(B, tile_b)
    b_pad = _round_up(B, tile)
    num_tiles = b_pad // tile
    if b_pad != B:
        x_aug = jnp.pad(x_aug, ((0, b_pad - B), (0, 0)))

    out = pl.pallas_call(
        mlp_kernel,
        out_shape=jax.ShapeDtypeStruct((num_tiles, 1, tile), jnp.float32),
        grid=(num_tiles,),
        in_specs=[
            pl.BlockSpec((tile, F_AUG), lambda i: (i, 0)),    # x: streamed
            pl.BlockSpec((F_AUG, H_MID), lambda i: (0, 0)),   # W12+b12: resident
            pl.BlockSpec((H_MID, H_OUT), lambda i: (0, 0)),   # W3: resident
            pl.BlockSpec((1, H_OUT), lambda i: (0, 0)),       # W4^T: resident
            pl.BlockSpec((1, H_OUT), lambda i: (0, 0)),       # b3: resident
            pl.BlockSpec(memory_space=pltpu.MemorySpace.SMEM),  # b4 scalar
        ],
        out_specs=pl.BlockSpec((1, 1, tile), lambda i: (i, 0, 0)),
        compiler_params=pltpu.CompilerParams(
            dimension_semantics=("parallel",),     # shard batch grid on v7x
            vmem_limit_bytes=32 * 1024 * 1024),
    )(x_aug, w12_aug, w3, w4t, b3, b4)

    # (num_tiles, 1, tile): tile t, lane j  <->  batch row t*tile + j.
    return out.reshape(b_pad, 1)[:B]


def init_params(key):
    """Deterministic init mimicking torch.nn.Linear default U(-1/sqrt(fan_in), +)."""
    dims = [(7, 50), (50, 200), (200, 50), (50, 1)]
    params = {}
    keys = jax.random.split(key, 2 * len(dims))
    for i, (fan_in, fan_out) in enumerate(dims):
        bound = 1.0 / jnp.sqrt(jnp.float32(fan_in))
        w = jax.random.uniform(keys[2 * i], (fan_in, fan_out),
                               minval=-bound, maxval=bound, dtype=jnp.float32)
        b = jax.random.uniform(keys[2 * i + 1], (1, fan_out),
                               minval=-bound, maxval=bound, dtype=jnp.float32)
        params[f"w{i + 1}"] = w
        params[f"b{i + 1}"] = b
    return params


if __name__ == "__main__":
    key = jax.random.PRNGKey(0)
    pkey, xkey, xkey2 = jax.random.split(key, 3)
    params = init_params(pkey)

    def ref(x, p):  # unfused pure-JAX f32 reference, matches the PyTorch module
        h = x @ p["w1"] + p["b1"]
        h = h @ p["w2"] + p["b2"]
        h = jnp.maximum(h, 0.0)
        h = h @ p["w3"] + p["b3"]
        h = jnp.maximum(h, 0.0)
        h = h @ p["w4"] + p["b4"]
        return jax.nn.sigmoid(h)

    # Tolerance loosened for bf16 MXU operands (accumulation stays f32).
    TOL = 2e-2

    # Small batch (single tile).
    B = 8
    x = jax.random.normal(xkey, (B, F_IN), dtype=jnp.float32)
    out = jax.block_until_ready(dl_model_forward(x, params))
    assert out.shape == (B, 1), out.shape
    assert jnp.max(jnp.abs(out - ref(x, params))) < TOL

    # Larger, non-multiple batch with the default tile: exercises the >=2-tile
    # clamp (2 tiles of 152) + batch padding.
    B2 = 300
    x2 = jax.random.normal(xkey2, (B2, F_IN), dtype=jnp.float32)
    out2 = jax.block_until_ready(dl_model_forward(x2, params))
    assert out2.shape == (B2, 1), out2.shape
    assert jnp.max(jnp.abs(out2 - ref(x2, params))) < TOL

    # Same batch with an explicit small tile: exercises a 3-step grid.
    out3 = jax.block_until_ready(dl_model_forward(x2, params, tile_b=128))
    assert out3.shape == (B2, 1), out3.shape
    assert jnp.max(jnp.abs(out3 - ref(x2, params))) < TOL

    print("KERNEL_OK")
</pallas_src>

<mosaic_0001>
module attributes {stable_mosaic.version = 11 : i64} {
  func.func @mlp_kernel(%arg0: i32, %arg1: memref<8x8xf32, #tpu.memory_space<vmem>>, %arg2: memref<8x200xbf16, #tpu.memory_space<vmem>>, %arg3: memref<200x50xbf16, #tpu.memory_space<vmem>>, %arg4: memref<1x50xbf16, #tpu.memory_space<vmem>>, %arg5: memref<1x50xf32, #tpu.memory_space<vmem>>, %arg6: memref<1x1xf32, #tpu.memory_space<smem>>, %arg7: memref<1x1x8xf32, #tpu.memory_space<vmem>>) attributes {dimension_semantics = [#tpu.dimension_semantics<parallel>], iteration_bounds = array<i64: 1>, scalar_prefetch = 0 : i64, scratch_operands = 0 : i64, tpu.core_type = #tpu.core_type<tc>, window_params = [{transform_indices = @transform_0, window_bounds = array<i64: 8, 8>}, {pipeline_mode = #tpu.pipeline_mode<synchronous>, transform_indices = @transform_1, window_bounds = array<i64: 8, 200>}, {pipeline_mode = #tpu.pipeline_mode<synchronous>, transform_indices = @transform_2, window_bounds = array<i64: 200, 50>}, {pipeline_mode = #tpu.pipeline_mode<synchronous>, transform_indices = @transform_3, window_bounds = array<i64: 1, 50>}, {pipeline_mode = #tpu.pipeline_mode<synchronous>, transform_indices = @transform_4, window_bounds = array<i64: 1, 50>}, {transform_indices = @transform_5, window_bounds = array<i64: 1, 1>}, {transform_indices = @transform_6, window_bounds = array<i64: 1, 1, 8>}]} {
    %c0 = arith.constant 0 : index
    %c0_0 = arith.constant 0 : index
    %0 = vector.load %arg1[%c0, %c0_0] : memref<8x8xf32, #tpu.memory_space<vmem>>, vector<8x8xf32>
    %1 = arith.truncf %0 : vector<8x8xf32> to vector<8x8xbf16>
    %c0_1 = arith.constant 0 : index
    %c0_2 = arith.constant 0 : index
    %2 = vector.load %arg2[%c0_1, %c0_2] : memref<8x200xbf16, #tpu.memory_space<vmem>>, vector<8x200xbf16>
    %cst = arith.constant dense<0.000000e+00> : vector<8x200xf32>
    %3 = tpu.matmul %1, %2, %cst {dimension_numbers = #tpu.dot_dimension_numbers<[1], [0], [0], [1], [0, 0, 1, 1], [], []>} : vector<8x8xbf16>, vector<8x200xbf16>, vector<8x200xf32> -> vector<8x200xf32>
    %cst_3 = arith.constant 0.000000e+00 : f32
    %4 = vector.broadcast %cst_3 : f32 to vector<8x200xf32>
    %5 = arith.maximumf %3, %4 : vector<8x200xf32>
    %6 = arith.truncf %5 : vector<8x200xf32> to vector<8x200xbf16>
    %c0_4 = arith.constant 0 : index
    %c0_5 = arith.constant 0 : index
    %7 = vector.load %arg3[%c0_4, %c0_5] : memref<200x50xbf16, #tpu.memory_space<vmem>>, vector<200x50xbf16>
    %cst_6 = arith.constant dense<0.000000e+00> : vector<8x50xf32>
    %8 = tpu.matmul %6, %7, %cst_6 {dimension_numbers = #tpu.dot_dimension_numbers<[1], [0], [0], [1], [0, 0, 1, 1], [], []>} : vector<8x200xbf16>, vector<200x50xbf16>, vector<8x50xf32> -> vector<8x50xf32>
    %c0_7 = arith.constant 0 : index
    %c0_8 = arith.constant 0 : index
    %9 = vector.load %arg5[%c0_7, %c0_8] : memref<1x50xf32, #tpu.memory_space<vmem>>, vector<1x50xf32>
    %10 = vector.broadcast %9 : vector<1x50xf32> to vector<8x50xf32>
    %11 = arith.addf %8, %10 : vector<8x50xf32>
    %cst_9 = arith.constant 0.000000e+00 : f32
    %12 = vector.broadcast %cst_9 : f32 to vector<8x50xf32>
    %13 = arith.maximumf %11, %12 : vector<8x50xf32>
    %c0_10 = arith.constant 0 : index
    %c0_11 = arith.constant 0 : index
    %14 = vector.load %arg4[%c0_10, %c0_11] : memref<1x50xbf16, #tpu.memory_space<vmem>>, vector<1x50xbf16>
    %15 = arith.truncf %13 : vector<8x50xf32> to vector<8x50xbf16>
    %cst_12 = arith.constant dense<0.000000e+00> : vector<1x8xf32>
    %16 = tpu.matmul %14, %15, %cst_12 {dimension_numbers = #tpu.dot_dimension_numbers<[1], [1], [0], [0], [0, 0, 1, 0], [], []>} : vector<1x50xbf16>, vector<8x50xbf16>, vector<1x8xf32> -> vector<1x8xf32>
    %c0_13 = arith.constant 0 : index
    %c0_14 = arith.constant 0 : index
    %17 = memref.load %arg6[%c0_13, %c0_14] : memref<1x1xf32, #tpu.memory_space<smem>>
    %18 = vector.broadcast %17 : f32 to vector<1x8xf32>
    %19 = arith.addf %16, %18 : vector<1x8xf32>
    %20 = arith.negf %19 : vector<1x8xf32>
    %21 = math.exp %20 : vector<1x8xf32>
    %cst_15 = arith.constant 1.000000e+00 : f32
    %22 = vector.broadcast %cst_15 : f32 to vector<1x8xf32>
    %23 = arith.addf %22, %21 : vector<1x8xf32>
    %24 = arith.divf %22, %23 : vector<1x8xf32>
    %c0_16 = arith.constant 0 : index
    %c0_17 = arith.constant 0 : index
    %c0_18 = arith.constant 0 : index
    %25 = vector.load %arg7[%c0_16, %c0_17, %c0_18] : memref<1x1x8xf32, #tpu.memory_space<vmem>>, vector<1x1x8xf32>
    %26 = vector.shape_cast %25 : vector<1x1x8xf32> to vector<1x8xf32>
    %27 = vector.shape_cast %24 : vector<1x8xf32> to vector<1x1x8xf32>
    tpu.vector_store %arg7[%c0_16, %c0_17, %c0_18], %27 {strides = array<i32>} : memref<1x1x8xf32, #tpu.memory_space<vmem>>, vector<1x1x8xf32>,
    return
  }
  func.func @transform_0(%arg0: i32) -> (i32, i32) {
    %c0_i32 = arith.constant 0 : i32
    %c0_i32_0 = arith.constant 0 : i32
    return %arg0, %c0_i32 : i32, i32
  }
  func.func @transform_1(%arg0: i32) -> (i32, i32) {
    %c0_i32 = arith.constant 0 : i32
    %c0_i32_0 = arith.constant 0 : i32
    %c0_i32_1 = arith.constant 0 : i32
    return %c0_i32, %c0_i32_0 : i32, i32
  }
  func.func @transform_2(%arg0: i32) -> (i32, i32) {
    %c0_i32 = arith.constant 0 : i32
    %c0_i32_0 = arith.constant 0 : i32
    %c0_i32_1 = arith.constant 0 : i32
    return %c0_i32, %c0_i32_0 : i32, i32
  }
  func.func @transform_3(%arg0: i32) -> (i32, i32) {
    %c0_i32 = arith.constant 0 : i32
    %c0_i32_0 = arith.constant 0 : i32
    %c0_i32_1 = arith.constant 0 : i32
    return %c0_i32, %c0_i32_0 : i32, i32
  }
  func.func @transform_4(%arg0: i32) -> (i32, i32) {
    %c0_i32 = arith.constant 0 : i32
    %c0_i32_0 = arith.constant 0 : i32
    %c0_i32_1 = arith.constant 0 : i32
    return %c0_i32, %c0_i32_0 : i32, i32
  }
  func.func @transform_5(%arg0: i32) -> (i32, i32) {
    %c0_i32 = arith.constant 0 : i32
    %c0_i32_0 = arith.constant 0 : i32
    %c0_i32_1 = arith.constant 0 : i32
    return %c0_i32, %c0_i32_0 : i32, i32
  }
  func.func @transform_6(%arg0: i32) -> (i32, i32, i32) {
    %c0_i32 = arith.constant 0 : i32
    %c0_i32_0 = arith.constant 0 : i32
    %c0_i32_1 = arith.constant 0 : i32
    return %arg0, %c0_i32, %c0_i32_0 : i32, i32, i32
  }
}

</mosaic_0001>

<llo_original>
// kernel: tpu_custom_call.1
$region0: #{tpu_custom_call.1}
  #allocation0 [shape = 'u32[]', space=smem, size = 0x4, offset = 0x4, fixed_abs, tag = 'smem constant byte address 0x4 - core index']
  #allocation1 [shape = 'u32[144,128]{1,0:T(1,128)}', space=vmem, size = 0x12000, scoped, tag = 'internal scratch']
  #allocation2 [shape = 'f32[1,1]{1,0:T(1,128)S(6)}', space=smem, size = 0x200, scoped, tag = 'scoped memory for tpu_custom_call.1']
  %s0 = inlined_call_operand.vmem [shape: f32[8,8], index: 0, kind: input, shape index: {}]
  %s1 = inlined_call_operand.vmem [shape: bf16[8,200], index: 1, kind: input, shape index: {}]
  %s2 = inlined_call_operand.vmem [shape: bf16[200,50], index: 2, kind: input, shape index: {}]
  %s3 = inlined_call_operand.vmem [shape: bf16[1,50], index: 3, kind: input, shape index: {}]
  %s4 = inlined_call_operand.vmem [shape: f32[1,50], index: 4, kind: input, shape index: {}]
  %s5 = inlined_call_operand.<no memory space> [shape: f32[1,1], index: 5, kind: input, shape index: {}]
  %s6 = inlined_call_operand.hbm [shape: f32[1,1,8], index: 6, kind: output, shape index: {}]
  %s7 = sld [smem:[#allocation0]]
  $region34: #{tpu_custom_call.1} parent=0
    _
  %s9 = ssub.s32 1, %s7
  %s10 = scalar_select 0, %s9, %s7
  %11 = sst [smem:[#allocation2]] %s5
  $region1: #{tpu_custom_call.1} parent=0
    #allocation3 [shape = 'u8[512]{0}', space=vmem, size = 0x400, scoped, tag = 'output window, operand 0, single buffered']
    #allocation4 [shape = 's32[1]{0}', space=sflag, size = 0x4, scoped, tag = 'scoped memory for tpu_custom_call.1']
    %12 = vsyncpa [#allocation4], 0
    // Predicated region
    $region2: #{tpu_custom_call.1} parent=1 // pred_check
      _
    $region3: #{tpu_custom_call.1} parent=1 // pred_check_branch
      %14 = sbr.rel (0) target = $region5
    $region4: #{tpu_custom_call.1} parent=1 // pred_region
      _
    $region5: #{tpu_custom_call.1} parent=1 // pred_fallthru
      _
    // Predicated region
    $region6: #{tpu_custom_call.1} parent=1 // pred_check
      _
    $region7: #{tpu_custom_call.1} parent=1 // pred_check_branch
      %16 = sbr.rel (0) target = $region9
    $region8: #{tpu_custom_call.1} parent=1 // pred_region
      _
    $region9: #{tpu_custom_call.1} parent=1 // pred_fallthru
      _
    // Predicated region
    $region10: #{tpu_custom_call.1} parent=1 // pred_check
      _
    $region11: #{tpu_custom_call.1} parent=1 // pred_check_branch
      %18 = sbr.rel (0) target = $region13
    $region12: #{tpu_custom_call.1} parent=1 // pred_region
      _
    $region13: #{tpu_custom_call.1} parent=1 // pred_fallthru
      _
    // Predicated region
    $region14: #{tpu_custom_call.1} parent=1 // pred_check
      _
    $region15: #{tpu_custom_call.1} parent=1 // pred_check_branch
      %20 = sbr.rel (0) target = $region17
    $region16: #{tpu_custom_call.1} parent=1 // pred_region
      _
    $region17: #{tpu_custom_call.1} parent=1 // pred_fallthru
      _
    // Predicated region
    $region18: #{tpu_custom_call.1} parent=1 // pred_check
      _
    $region19: #{tpu_custom_call.1} parent=1 // pred_check_branch
      %22 = sbr.rel (0) target = $region21
    $region20: #{tpu_custom_call.1} parent=1 // pred_region
      _
    $region21: #{tpu_custom_call.1} parent=1 // pred_fallthru
      _
    // Predicated region
    $region22: #{tpu_custom_call.1} parent=1 // pred_check
      _
    $region23: #{tpu_custom_call.1} parent=1 // pred_check_branch
      %24 = sbr.rel (0) target = $region25
    $region24: #{tpu_custom_call.1} parent=1 // pred_region
      _
    $region25: #{tpu_custom_call.1} parent=1 // pred_fallthru
      _
    %v26 = vld [vmem:[%s0] sm:$0xff]
    %v27 = vpack.c.bf16 %v26, %v26
    %v28 = vld [vmem:[%s1] sm:$0xff]
    %v30 = vunpack.c.l.b16 %v28
    %v31 = vunpack.c.h.b16 %v28
    %v32 = vpack.c.b16 %v30, %v30
    %v33 = vpack.c.b16 %v31, %v31
    %vm34 = vcmask 64512
    %v36 = vsel %vm34, %v27, 0
    %vm38 = vcmask 1043456
    %v40 = vsel %vm38, %v32, 0
    %v43 = vsel %vm38, %v33, 0
    %45 = vmatprep.subr.bf16.mxu0 %v43
    %46 = vmatpush1.bf16.msra.mxu0 %v40
    %47 = vmatprep.subr.bf16.mxu0 0
    %48 = vmatpush1.bf16.msra.mxu0 0
    %49 = vmatprep.subr.bf16.mxu0 0
    %50 = vmatpush1.bf16.msra.mxu0 0
    %51 = vmatprep.subr.bf16.mxu0 0
    %52 = vmatpush1.bf16.msra.mxu0 0
    %53 = vmatprep.subr.bf16.mxu0 0
    %54 = vmatpush1.bf16.msra.mxu0 0
    %55 = vmatprep.subr.bf16.mxu0 0
    %56 = vmatpush1.bf16.msra.mxu0 0
    %57 = vmatprep.subr.bf16.mxu0 0
    %58 = vmatpush1.bf16.msra.mxu0 0
    %59 = vmatprep.subr.bf16.mxu0 0
    %60 = vmatpush1.bf16.msra.mxu0 0
    %61 = vmatprep.subr.bf16.mxu0 0
    %62 = vmatpush1.bf16.msra.mxu0 0
    %63 = vmatprep.subr.bf16.mxu0 0
    %64 = vmatpush1.bf16.msra.mxu0 0
    %65 = vmatprep.subr.bf16.mxu0 0
    %66 = vmatpush1.bf16.msra.mxu0 0
    %67 = vmatprep.subr.bf16.mxu0 0
    %68 = vmatpush1.bf16.msra.mxu0 0
    %69 = vmatprep.subr.bf16.mxu0 0
    %70 = vmatpush1.bf16.msra.mxu0 0
    %71 = vmatprep.subr.bf16.mxu0 0
    %72 = vmatpush1.bf16.msra.mxu0 0
    %73 = vmatprep.subr.bf16.mxu0 0
    %74 = vmatpush1.bf16.msra.mxu0 0
    %75 = vmatprep.subr.bf16.mxu0 0
    %76 = vmatpush1.bf16.msra.mxu0 0
    %77 = vmatprep.mubr.bf16.mxu0 0
    %78 = vmatmul.mubr.bf16.gmra.mrb[0].mxu0 %v36
    %v79 = vpop.f32.mrb[0].mxu0
    %v80 = vadd.f32 0.0, %v79
    %v81 = vpop.f32.mrb[0].mxu0
    %v82 = vadd.f32 0.0, %v81
    %v83 = vpop.f32.mrb[0].mxu0
    %v84 = vpop.f32.mrb[0].mxu0
    %85 = vdwg.mxu0
    %v86 = vmax.f32 %v80, 0.0
    %v87 = vmax.f32 %v82, 0.0
    %v88 = vpack.c.bf16 %v86, %v86
    %v89 = vpack.c.bf16 %v87, %v87
    %v90 = vld [vmem:[%s2] sm:$0xf]
    %v91 = vld [vmem:[%s2 + $0x4] sm:$0xf]
    %v92 = vld [vmem:[%s2 + $0x8] sm:$0xf]
    %v93 = vld [vmem:[%s2 + $0xc] sm:$0xf]
    %v94 = vld [vmem:[%s2 + $0x10] sm:$0xf]
    %v95 = vld [vmem:[%s2 + $0x14] sm:$0xf]
    %v96 = vld [vmem:[%s2 + $0x18] sm:$0xf]
    %v97 = vld [vmem:[%s2 + $0x1c] sm:$0xf]
    %v98 = vld [vmem:[%s2 + $0x20] sm:$0xf]
    %v99 = vld [vmem:[%s2 + $0x24] sm:$0xf]
    %v100 = vld [vmem:[%s2 + $0x28] sm:$0xf]
    %v101 = vld [vmem:[%s2 + $0x2c] sm:$0xf]
    %v102 = vld [vmem:[%s2 + $0x30] sm:$0xf]
    %v103 = vld [vmem:[%s2 + $0x34] sm:$0xf]
    %v104 = vld [vmem:[%s2 + $0x38] sm:$0xf]
    %v105 = vld [vmem:[%s2 + $0x3c] sm:$0xf]
    %v106 = vld [vmem:[%s2 + $0x40] sm:$0xf]
    %v107 = vld [vmem:[%s2 + $0x44] sm:$0xf]
    %v108 = vld [vmem:[%s2 + $0x48] sm:$0xf]
    %v109 = vld [vmem:[%s2 + $0x4c] sm:$0xf]
    %v110 = vld [vmem:[%s2 + $0x50] sm:$0xf]
    %v111 = vld [vmem:[%s2 + $0x54] sm:$0xf]
    %v112 = vld [vmem:[%s2 + $0x58] sm:$0xf]
    %v113 = vld [vmem:[%s2 + $0x5c] sm:$0xf]
    %v114 = vld [vmem:[%s2 + $0x60] sm:$0xf]
    %v115 = vld [vmem:[%s4] sm:$0x1]
    %v117 = vlaneseq
    %v118 = vshrl.u32 %v117, 7
    %v119 = vsub.s32 0, %v118
    %v120 = vrot.slane %v115, %v119
    %v147 = vunpack.c.l.b16 %v90
    %v148 = vunpack.c.l.b16 %v91
    %v149 = vunpack.c.l.b16 %v92
    %v150 = vunpack.c.l.b16 %v93
    %v151 = vunpack.c.l.b16 %v94
    %v152 = vunpack.c.l.b16 %v95
    %v153 = vunpack.c.l.b16 %v96
    %v154 = vunpack.c.l.b16 %v97
    %v155 = vunpack.c.l.b16 %v98
    %v156 = vunpack.c.l.b16 %v99
    %v157 = vunpack.c.l.b16 %v100
    %v158 = vunpack.c.l.b16 %v101
    %v159 = vunpack.c.l.b16 %v102
    %v160 = vunpack.c.l.b16 %v103
    %v161 = vunpack.c.l.b16 %v104
    %v162 = vunpack.c.l.b16 %v105
    %v163 = vunpack.c.l.b16 %v106
    %v164 = vunpack.c.l.b16 %v107
    %v165 = vunpack.c.l.b16 %v108
    %v166 = vunpack.c.l.b16 %v109
    %v167 = vunpack.c.l.b16 %v110
    %v168 = vunpack.c.l.b16 %v111
    %v169 = vunpack.c.l.b16 %v112
    %v170 = vunpack.c.l.b16 %v113
    %v171 = vunpack.c.l.b16 %v114
    %v172 = vpack.c.b16 %v148, %v147
    %v173 = vpack.c.b16 %v150, %v149
    %v174 = vpack.c.b16 %v152, %v151
    %v175 = vpack.c.b16 %v154, %v153
    %v176 = vpack.c.b16 %v156, %v155
    %v177 = vpack.c.b16 %v158, %v157
    %v178 = vpack.c.b16 %v160, %v159
    %v179 = vpack.c.b16 %v162, %v161
    %v180 = vpack.c.b16 %v164, %v163
    %v181 = vpack.c.b16 %v166, %v165
    %v182 = vpack.c.b16 %v168, %v167
    %v183 = vpack.c.b16 %v170, %v169
    %v184 = vpack.c.b16 %v171, %v171
    %vm197 = vcmask 588800
    %v199 = vsel %vm197, %v89, 0
    %v202 = vsel %vm38, %v184, 0
    %204 = vmatprep.subr.bf16.mxu0 0
    %205 = vmatpush1.bf16.msra.mxu0 %v172
    %206 = vmatprep.subr.bf16.mxu0 0
    %207 = vmatpush1.bf16.msra.mxu0 %v173
    %208 = vmatprep.subr.bf16.mxu0 0
    %209 = vmatpush1.bf16.msra.mxu0 %v174
    %210 = vmatprep.subr.bf16.mxu0 0
    %211 = vmatpush1.bf16.msra.mxu0 %v175
    %212 = vmatprep.subr.bf16.mxu0 0
    %213 = vmatpush1.bf16.msra.mxu0 %v176
    %214 = vmatprep.subr.bf16.mxu0 0
    %215 = vmatpush1.bf16.msra.mxu0 %v177
    %216 = vmatprep.subr.bf16.mxu0 0
    %217 = vmatpush1.bf16.msra.mxu0 %v178
    %218 = vmatprep.subr.bf16.mxu0 0
    %219 = vmatpush1.bf16.msra.mxu0 %v179
    %220 = vmatprep.subr.bf16.mxu0 0
    %221 = vmatpush1.bf16.msra.mxu0 %v180
    %222 = vmatprep.subr.bf16.mxu0 0
    %223 = vmatpush1.bf16.msra.mxu0 %v181
    %224 = vmatprep.subr.bf16.mxu0 0
    %225 = vmatpush1.bf16.msra.mxu0 %v182
    %226 = vmatprep.subr.bf16.mxu0 0
    %227 = vmatpush1.bf16.msra.mxu0 %v183
    %228 = vmatprep.subr.bf16.mxu0 0
    %229 = vmatpush1.bf16.msra.mxu0 %v202
    %230 = vmatprep.subr.bf16.mxu0 0
    %231 = vmatpush1.bf16.msra.mxu0 0
    %232 = vmatprep.subr.bf16.mxu0 0
    %233 = vmatpush1.bf16.msra.mxu0 0
    %234 = vmatprep.subr.bf16.mxu0 0
    %235 = vmatpush1.bf16.msra.mxu0 0
    %236 = vmatprep.mubr.bf16.mxu0 %v199
    %237 = vmatmul.mubr.bf16.gmra.mrb[0].mxu0 %v88
    %v238 = vpop.f32.mrb[0].mxu0
    %v239 = vadd.f32 %v120, %v238
    %v240 = vpop.f32.mrb[0].mxu0
    %v241 = vpop.f32.mrb[0].mxu0
    %v242 = vpop.f32.mrb[0].mxu0
    %243 = vdwg.mxu0
    %v244 = vmax.f32 %v239, 0.0
    %v245 = vld [vmem:[%s3] sm:$0x1]
    %v246 = vpack.c.bf16 %v244, %v244
    %s247 = sld [smem:[#allocation2]]
    %v248 = vstv %s247
    %vm249 = vcmask 408576
    %v251 = vsel %vm249, %v245, 0
    %v254 = vsel %vm249, %v246, 0
    %256 = vmatprep.subr.bf16.mxu0 0
    %257 = vmatpush1.bf16.xpose.msra.mxu0 %v254
    %258 = vmatprep.subr.bf16.mxu0 0
    %259 = vmatpush1.bf16.xpose.msra.mxu0 0
    %260 = vmatprep.subr.bf16.mxu0 0
    %261 = vmatpush1.bf16.xpose.msra.mxu0 0
    %262 = vmatprep.subr.bf16.mxu0 0
    %263 = vmatpush1.bf16.xpose.msra.mxu0 0
    %264 = vmatprep.subr.bf16.mxu0 0
    %265 = vmatpush1.bf16.xpose.msra.mxu0 0
    %266 = vmatprep.subr.bf16.mxu0 0
    %267 = vmatpush1.bf16.xpose.msra.mxu0 0
    %268 = vmatprep.subr.bf16.mxu0 0
    %269 = vmatpush1.bf16.xpose.msra.mxu0 0
    %270 = vmatprep.subr.bf16.mxu0 0
    %271 = vmatpush1.bf16.xpose.msra.mxu0 0
    %272 = vmatprep.subr.bf16.mxu0 0
    %273 = vmatpush1.bf16.xpose.msra.mxu0 0
    %274 = vmatprep.subr.bf16.mxu0 0
    %275 = vmatpush1.bf16.xpose.msra.mxu0 0
    %276 = vmatprep.subr.bf16.mxu0 0
    %277 = vmatpush1.bf16.xpose.msra.mxu0 0
    %278 = vmatprep.subr.bf16.mxu0 0
    %279 = vmatpush1.bf16.xpose.msra.mxu0 0
    %280 = vmatprep.subr.bf16.mxu0 0
    %281 = vmatpush1.bf16.xpose.msra.mxu0 0
    %282 = vmatprep.subr.bf16.mxu0 0
    %283 = vmatpush1.bf16.xpose.msra.mxu0 0
    %284 = vmatprep.subr.bf16.mxu0 0
    %285 = vmatpush1.bf16.xpose.msra.mxu0 0
    %286 = vmatprep.subr.bf16.mxu0 0
    %287 = vmatpush1.bf16.xpose.msra.mxu0 0
    %288 = vmatprep.mubr.bf16.mxu0 0
    %289 = vmatmul.mubr.bf16.gmra.mrb[0].mxu0 %v251
    %v290 = vpop.f32.mrb[0].mxu0
    %v291 = vadd.f32 %v248, %v290
    %v292 = vpop.f32.mrb[0].mxu0
    %v293 = vpop.f32.mrb[0].mxu0
    %v294 = vpop.f32.mrb[0].mxu0
    %295 = vdwg.mxu0
    %v296 = vxor.u32 %v291, 2147483648
    %v297 = vmul.f32 %v296, 1.442695
    %v298 = vpow.pop %v297
    %v299 = vadd.f32 %v298, 1.0
    %v300 = vrcp.pop %v299
    %v301 = vmul.f32 1.0, %v300
    %vm302 = vcmask 57344
    %303 = vst.msk [vmem:[#allocation3] sm:$0x1] %vm302, %v301
    // Predicated region
    $region26: #{tpu_custom_call.1} parent=1 // pred_check
      _
    $region27: #{tpu_custom_call.1} parent=1 // pred_check_branch
      %305 = sbr.rel (0) target = $region29
    $region28: #{tpu_custom_call.1} parent=1 // pred_region
      %s307 = ssub.s32 16, 16
      %308 = vsyncadd [#allocation4], %s307
      %s310 = sshll.u32 [#allocation3], 4
      %s311 = int_to_ptr.vmem [resolvable:$true] %s310
      %313 = dma.vmem_to_hbm [thread:$0]  %s311, 16, %s6, [#allocation4]
    $region29: #{tpu_custom_call.1} parent=1 // pred_fallthru
      _
    // Predicated region
    $region30: #{tpu_custom_call.1} parent=1 // pred_check
      _
    $region31: #{tpu_custom_call.1} parent=1 // pred_check_branch
      %315 = sbr.rel (0) target = $region33
    $region32: #{tpu_custom_call.1} parent=1 // pred_region
      %316 = dma.done [#allocation4], 16
    $region33: #{tpu_custom_call.1} parent=1 // pred_fallthru
      _
    %317 = vsyncpa [#allocation4], 1

</llo_original>
